<compile_context>
chip_gen: v5e
topology: v5e:2x2
jax: 0.10.0
libtpu: 0.0.40
codegen_flags: <defaults>
</compile_context>

<pallas_src>
import functools

import jax
import jax.numpy as jnp
from jax.experimental import pallas as pl
from jax.experimental.pallas import tpu as pltpu

EPS = 1e-5


def sep_conv_kernel(x_ref, wt_ref, pw_ref, out_ref, *, N, Cin, Cout, H, W):
    """SepConv-3x3 forward, single program, fully VMEM-resident, 2-D (N*C, H*W) layout.

    x_ref  : (N*Cin, HW)              input rows (NCHW with N,C folded; spatial in lanes)
    wt_ref : (18, N*Cin, HW)          fused (edge-mask x depthwise-weight) planes;
                                      planes [0:9] -> dwconv #1, [9:18] -> dwconv #2,
                                      tap index t = 3*(oi+1) + (oj+1)
    pw_ref : (N*Cin + N*Cout, N*Cin)  block-diagonal 1x1-conv weights:
                                      rows [0:N*Cin] = kron(I_N, pw1), rest = kron(I_N, pw2)
    out_ref: (N*Cout, HW)
    """
    HW = H * W
    NCin = N * Cin
    NCout = N * Cout

    def dwconv3x3(inp, base):
        # out[r, f] = sum_t inp[r, f + s_t] * Wt[base+t, r, f]
        # Shifted reads via XLU lane rotation; the fused plane already carries both the
        # depthwise weight and the zero-padding edge mask -> one VPU multiply per tap.
        acc = None
        for oi in (-1, 0, 1):
            for oj in (-1, 0, 1):
                t = (oi + 1) * 3 + (oj + 1)
                s = oi * W + oj                                  # flat-index offset of tap
                v = inp if s == 0 else pltpu.roll(inp, (-s) % HW, axis=1)
                term = v * wt_ref[base + t]
                acc = term if acc is None else acc + term        # first tap initializes acc
        return acc

    def pwconv1x1(inp, w_bd):
        # 1x1 conv with block-diagonal weight as outer-product accumulation over the tiny
        # contraction dim: exact f32 on the VPU, full-sublane (rows, HW) operands.
        # TODO(synk): at realistic C (~36) switch to jnp.dot on the MXU with (N*HW_tile, C).
        acc = None
        for k in range(inp.shape[0]):
            term = w_bd[:, k:k + 1] * inp[k:k + 1, :]            # (R,1)*(1,HW) -> (R,HW)
            acc = term if acc is None else acc + term
        return acc

    def batchnorm(v, c):
        # BatchNorm2d(affine=False), training-mode batch stats per channel over (N, H, W).
        # Rows of v are n*c + channel: reduce lanes first, then fold the N row-groups
        # together with sublane rolls by multiples of c (rows r and r+g*c share a channel);
        # the roll-sum also leaves the stats already broadcast back to every row.
        n_groups = v.shape[0] // c
        inv_n = 1.0 / (n_groups * v.shape[1])
        s1 = jnp.sum(v, axis=1, keepdims=True)                   # (n_groups*c, 1)
        s2 = jnp.sum(v * v, axis=1, keepdims=True)
        s1_bc, s2_bc = s1, s2
        for g in range(1, n_groups):
            s1_bc = s1_bc + pltpu.roll(s1, g * c, axis=0)
            s2_bc = s2_bc + pltpu.roll(s2, g * c, axis=0)
        mean = s1_bc * inv_n
        # One-pass variance E[x^2] - mean^2 can cancel slightly negative: clamp before rsqrt.
        var = jnp.maximum(s2_bc * inv_n - mean * mean, 0.0)
        return (v - mean) * jax.lax.rsqrt(var + EPS)

    x = jnp.maximum(x_ref[...], 0.0)                             # ReLU #1
    pw1_bd = pw_ref[0:NCin, :]                                   # (N*Cin,  N*Cin)
    pw2_bd = pw_ref[NCin:NCin + NCout, :]                        # (N*Cout, N*Cin)

    h = dwconv3x3(x, 0)                                          # depthwise 3x3 #1
    h = pwconv1x1(h, pw1_bd)                                     # 1x1 conv Cin -> Cin
    h = jnp.maximum(batchnorm(h, Cin), 0.0)                      # BN + ReLU #2
    h = dwconv3x3(h, 9)                                          # depthwise 3x3 #2
    h = pwconv1x1(h, pw2_bd)                                     # 1x1 conv Cin -> Cout
    out_ref[...] = batchnorm(h, Cout)                            # final BN, lane-dense store


@jax.jit
def new_mixed_op(x_nchw, dw1, pw1, dw2, pw2):
    """NewMixedOp forward with primitive='sep_conv_3x3', stride=1.

    x_nchw: (N, Cin, H, W) float32 (PyTorch layout)
    dw1, dw2: (Cin, 1, 3, 3) depthwise weights; pw1: (Cin, Cin, 1, 1); pw2: (Cout, Cin, 1, 1)
    returns (N, Cout, H, W).
    """
    N, Cin, H, W = x_nchw.shape
    HW = H * W
    Cout = pw2.shape[0]

    # NCHW already has C,H,W contiguous: folding (N,C) into rows and (H,W) into lanes is a
    # free reshape -- no transpose, no padding pass.
    x = x_nchw.reshape(N * Cin, HW).astype(jnp.float32)

    # Per-tap in-bounds masks over the flattened spatial axis (shape-only -> constant folded
    # under jit).  They implement the conv zero padding and kill the circular wrap /
    # cross-row bleed of the in-kernel lane rolls.
    f = jnp.arange(HW, dtype=jnp.int32)
    hh, ww = f // W, f % W
    masks = []
    for oi in (-1, 0, 1):
        for oj in (-1, 0, 1):
            ok = (hh + oi >= 0) & (hh + oi < H) & (ww + oj >= 0) & (ww + oj < W)
            masks.append(ok)
    tap_mask = jnp.stack(masks, axis=0).astype(jnp.float32)              # (9, HW)

    # Fuse edge mask and depthwise weight into per-tap planes, tiled over N, so the kernel
    # tap body is a single multiply: Wt[t, n*Cin + c, f] = dw[c, t] * mask[t, f].
    def fuse(dw):
        d = jnp.tile(dw.reshape(Cin, 9).astype(jnp.float32), (N, 1))     # (N*Cin, 9)
        return jnp.einsum("rt,tf->trf", d, tap_mask)                     # (9, N*Cin, HW)

    wt = jnp.concatenate([fuse(dw1), fuse(dw2)], axis=0)                 # (18, N*Cin, HW)

    # Block-diagonal pointwise weights: out(N*Co, HW) = kron(I_N, pw) applied to x(N*Ci, HW).
    eye = jnp.eye(N, dtype=jnp.float32)
    pw1_bd = jnp.kron(eye, pw1.reshape(Cin, Cin).astype(jnp.float32))    # (N*Cin,  N*Cin)
    pw2_bd = jnp.kron(eye, pw2.reshape(Cout, Cin).astype(jnp.float32))   # (N*Cout, N*Cin)
    pw = jnp.concatenate([pw1_bd, pw2_bd], axis=0)                       # (N*(Cin+Cout), N*Cin)

    kernel = functools.partial(sep_conv_kernel, N=N, Cin=Cin, Cout=Cout, H=H, W=W)
    out = pl.pallas_call(
        kernel,
        out_shape=jax.ShapeDtypeStruct((N * Cout, HW), jnp.float32),
        in_specs=[pl.BlockSpec(memory_space=pltpu.MemorySpace.VMEM)] * 3,
        out_specs=pl.BlockSpec(memory_space=pltpu.MemorySpace.VMEM),
    )(x, wt, pw)

    return out.reshape(N, Cout, H, W)                                    # free reshape back


def reference(x_nchw, dw1, pw1, dw2, pw2):
    """Pure-JAX reference (same math, PyTorch-shaped weights) for a numerical check."""
    x = x_nchw.astype(jnp.float32)
    N, Cin, H, W = x.shape

    def dwconv(inp, dw):                       # dw: (C, 1, 3, 3)
        p = jnp.pad(inp, ((0, 0), (0, 0), (1, 1), (1, 1)))
        acc = jnp.zeros_like(inp)
        for a in range(3):
            for b in range(3):
                acc = acc + p[:, :, a:a + H, b:b + W] * dw[:, 0, a, b][None, :, None, None]
        return acc

    def pwconv(inp, pw):                       # pw: (Cout, Cin, 1, 1)
        return jnp.einsum("nchw,dc->ndhw", inp, pw[:, :, 0, 0])

    def bn(v):
        m = jnp.mean(v, axis=(0, 2, 3), keepdims=True)
        s = jnp.mean((v - m) ** 2, axis=(0, 2, 3), keepdims=True)
        return (v - m) / jnp.sqrt(s + EPS)

    h = dwconv(jnp.maximum(x, 0.0), dw1)
    h = pwconv(h, pw1)
    h = jnp.maximum(bn(h), 0.0)
    h = dwconv(h, dw2)
    h = pwconv(h, pw2)
    return bn(h)


if __name__ == "__main__":
    # Module-implied shapes: NewMixedOp(c_in=4, c_out=8, stride=1, chosen_op -> 'sep_conv_3x3')
    N, Cin, Cout, H, W = 2, 4, 8, 16, 16

    key = jax.random.PRNGKey(0)
    k_x, k_dw1, k_pw1, k_dw2, k_pw2 = jax.random.split(key, 5)

    x = jax.random.normal(k_x, (N, Cin, H, W), jnp.float32)
    # Parameters in native PyTorch conv shapes: depthwise (C,1,3,3), pointwise (Cout,Cin,1,1).
    dw1 = jax.random.normal(k_dw1, (Cin, 1, 3, 3), jnp.float32) * 0.3
    pw1 = jax.random.normal(k_pw1, (Cin, Cin, 1, 1), jnp.float32) * 0.3
    dw2 = jax.random.normal(k_dw2, (Cin, 1, 3, 3), jnp.float32) * 0.3
    pw2 = jax.random.normal(k_pw2, (Cout, Cin, 1, 1), jnp.float32) * 0.3

    out = jax.block_until_ready(new_mixed_op(x, dw1, pw1, dw2, pw2))
    ref = jax.block_until_ready(reference(x, dw1, pw1, dw2, pw2))

    assert out.shape == (N, Cout, H, W)
    # f32 everywhere; tolerance covers reduction-order / rsqrt differences only.
    assert jnp.allclose(out, ref, atol=1e-3, rtol=1e-3), "mismatch vs reference"

    print("KERNEL_OK")
</pallas_src>

<mosaic_0001>
module attributes {stable_mosaic.version = 11 : i64} {
  func.func @sep_conv_kernel(%arg0: memref<8x256xf32, #tpu.memory_space<vmem>>, %arg1: memref<18x8x256xf32, #tpu.memory_space<vmem>>, %arg2: memref<24x8xf32, #tpu.memory_space<vmem>>, %arg3: memref<16x256xf32, #tpu.memory_space<vmem>>) attributes {dimension_semantics = [], scalar_prefetch = 0 : i64, scratch_operands = 0 : i64, tpu.core_type = #tpu.core_type<tc>} {
    %c0 = arith.constant 0 : index
    %c0_0 = arith.constant 0 : index
    %0 = vector.load %arg0[%c0, %c0_0] : memref<8x256xf32, #tpu.memory_space<vmem>>, vector<8x256xf32>
    %cst = arith.constant 0.000000e+00 : f32
    %1 = vector.broadcast %cst : f32 to vector<8x256xf32>
    %2 = arith.maximumf %0, %1 : vector<8x256xf32>
    %c0_1 = arith.constant 0 : index
    %c0_2 = arith.constant 0 : index
    %3 = vector.load %arg2[%c0_1, %c0_2] : memref<24x8xf32, #tpu.memory_space<vmem>>, vector<8x8xf32>
    %c8 = arith.constant 8 : index
    %c0_3 = arith.constant 0 : index
    %4 = vector.load %arg2[%c8, %c0_3] : memref<24x8xf32, #tpu.memory_space<vmem>>, vector<16x8xf32>
    %c17_i32 = arith.constant 17 : i32
    %5 = tpu.dynamic_rotate %2 by %c17_i32 dim 1 : vector<8x256xf32>, i32 -> vector<8x256xf32>
    %c0_4 = arith.constant 0 : index
    %c0_5 = arith.constant 0 : index
    %c0_6 = arith.constant 0 : index
    %6 = vector.load %arg1[%c0_4, %c0_5, %c0_6] : memref<18x8x256xf32, #tpu.memory_space<vmem>>, vector<1x8x256xf32>
    %7 = vector.shape_cast %6 : vector<1x8x256xf32> to vector<8x256xf32>
    %8 = arith.mulf %5, %7 : vector<8x256xf32>
    %c16_i32 = arith.constant 16 : i32
    %9 = tpu.dynamic_rotate %2 by %c16_i32 dim 1 : vector<8x256xf32>, i32 -> vector<8x256xf32>
    %c1 = arith.constant 1 : index
    %c0_7 = arith.constant 0 : index
    %c0_8 = arith.constant 0 : index
    %10 = vector.load %arg1[%c1, %c0_7, %c0_8] : memref<18x8x256xf32, #tpu.memory_space<vmem>>, vector<1x8x256xf32>
    %11 = vector.shape_cast %10 : vector<1x8x256xf32> to vector<8x256xf32>
    %12 = arith.mulf %9, %11 : vector<8x256xf32>
    %13 = arith.addf %8, %12 : vector<8x256xf32>
    %c15_i32 = arith.constant 15 : i32
    %14 = tpu.dynamic_rotate %2 by %c15_i32 dim 1 : vector<8x256xf32>, i32 -> vector<8x256xf32>
    %c2 = arith.constant 2 : index
    %c0_9 = arith.constant 0 : index
    %c0_10 = arith.constant 0 : index
    %15 = vector.load %arg1[%c2, %c0_9, %c0_10] : memref<18x8x256xf32, #tpu.memory_space<vmem>>, vector<1x8x256xf32>
    %16 = vector.shape_cast %15 : vector<1x8x256xf32> to vector<8x256xf32>
    %17 = arith.mulf %14, %16 : vector<8x256xf32>
    %18 = arith.addf %13, %17 : vector<8x256xf32>
    %c1_i32 = arith.constant 1 : i32
    %19 = tpu.dynamic_rotate %2 by %c1_i32 dim 1 : vector<8x256xf32>, i32 -> vector<8x256xf32>
    %c3 = arith.constant 3 : index
    %c0_11 = arith.constant 0 : index
    %c0_12 = arith.constant 0 : index
    %20 = vector.load %arg1[%c3, %c0_11, %c0_12] : memref<18x8x256xf32, #tpu.memory_space<vmem>>, vector<1x8x256xf32>
    %21 = vector.shape_cast %20 : vector<1x8x256xf32> to vector<8x256xf32>
    %22 = arith.mulf %19, %21 : vector<8x256xf32>
    %23 = arith.addf %18, %22 : vector<8x256xf32>
    %c4 = arith.constant 4 : index
    %c0_13 = arith.constant 0 : index
    %c0_14 = arith.constant 0 : index
    %24 = vector.load %arg1[%c4, %c0_13, %c0_14] : memref<18x8x256xf32, #tpu.memory_space<vmem>>, vector<1x8x256xf32>
    %25 = vector.shape_cast %24 : vector<1x8x256xf32> to vector<8x256xf32>
    %26 = arith.mulf %2, %25 : vector<8x256xf32>
    %27 = arith.addf %23, %26 : vector<8x256xf32>
    %c255_i32 = arith.constant 255 : i32
    %28 = tpu.dynamic_rotate %2 by %c255_i32 dim 1 : vector<8x256xf32>, i32 -> vector<8x256xf32>
    %c5 = arith.constant 5 : index
    %c0_15 = arith.constant 0 : index
    %c0_16 = arith.constant 0 : index
    %29 = vector.load %arg1[%c5, %c0_15, %c0_16] : memref<18x8x256xf32, #tpu.memory_space<vmem>>, vector<1x8x256xf32>
    %30 = vector.shape_cast %29 : vector<1x8x256xf32> to vector<8x256xf32>
    %31 = arith.mulf %28, %30 : vector<8x256xf32>
    %32 = arith.addf %27, %31 : vector<8x256xf32>
    %c241_i32 = arith.constant 241 : i32
    %33 = tpu.dynamic_rotate %2 by %c241_i32 dim 1 : vector<8x256xf32>, i32 -> vector<8x256xf32>
    %c6 = arith.constant 6 : index
    %c0_17 = arith.constant 0 : index
    %c0_18 = arith.constant 0 : index
    %34 = vector.load %arg1[%c6, %c0_17, %c0_18] : memref<18x8x256xf32, #tpu.memory_space<vmem>>, vector<1x8x256xf32>
    %35 = vector.shape_cast %34 : vector<1x8x256xf32> to vector<8x256xf32>
    %36 = arith.mulf %33, %35 : vector<8x256xf32>
    %37 = arith.addf %32, %36 : vector<8x256xf32>
    %c240_i32 = arith.constant 240 : i32
    %38 = tpu.dynamic_rotate %2 by %c240_i32 dim 1 : vector<8x256xf32>, i32 -> vector<8x256xf32>
    %c7 = arith.constant 7 : index
    %c0_19 = arith.constant 0 : index
    %c0_20 = arith.constant 0 : index
    %39 = vector.load %arg1[%c7, %c0_19, %c0_20] : memref<18x8x256xf32, #tpu.memory_space<vmem>>, vector<1x8x256xf32>
    %40 = vector.shape_cast %39 : vector<1x8x256xf32> to vector<8x256xf32>
    %41 = arith.mulf %38, %40 : vector<8x256xf32>
    %42 = arith.addf %37, %41 : vector<8x256xf32>
    %c239_i32 = arith.constant 239 : i32
    %43 = tpu.dynamic_rotate %2 by %c239_i32 dim 1 : vector<8x256xf32>, i32 -> vector<8x256xf32>
    %c8_21 = arith.constant 8 : index
    %c0_22 = arith.constant 0 : index
    %c0_23 = arith.constant 0 : index
    %44 = vector.load %arg1[%c8_21, %c0_22, %c0_23] : memref<18x8x256xf32, #tpu.memory_space<vmem>>, vector<1x8x256xf32>
    %45 = vector.shape_cast %44 : vector<1x8x256xf32> to vector<8x256xf32>
    %46 = arith.mulf %43, %45 : vector<8x256xf32>
    %47 = arith.addf %42, %46 : vector<8x256xf32>
    %48 = vector.extract_strided_slice %3 {offsets = [0, 0], sizes = [8, 1], strides = [1, 1]} : vector<8x8xf32> to vector<8x1xf32>
    %49 = vector.extract_strided_slice %47 {offsets = [0, 0], sizes = [1, 256], strides = [1, 1]} : vector<8x256xf32> to vector<1x256xf32>
    %50 = vector.broadcast %48 : vector<8x1xf32> to vector<8x256xf32>
    %51 = vector.broadcast %49 : vector<1x256xf32> to vector<8x256xf32>
    %52 = arith.mulf %50, %51 : vector<8x256xf32>
    %53 = vector.extract_strided_slice %3 {offsets = [0, 1], sizes = [8, 1], strides = [1, 1]} : vector<8x8xf32> to vector<8x1xf32>
    %54 = vector.extract_strided_slice %47 {offsets = [1, 0], sizes = [1, 256], strides = [1, 1]} : vector<8x256xf32> to vector<1x256xf32>
    %55 = vector.broadcast %53 : vector<8x1xf32> to vector<8x256xf32>
    %56 = vector.broadcast %54 : vector<1x256xf32> to vector<8x256xf32>
    %57 = arith.mulf %55, %56 : vector<8x256xf32>
    %58 = arith.addf %52, %57 : vector<8x256xf32>
    %59 = vector.extract_strided_slice %3 {offsets = [0, 2], sizes = [8, 1], strides = [1, 1]} : vector<8x8xf32> to vector<8x1xf32>
    %60 = vector.extract_strided_slice %47 {offsets = [2, 0], sizes = [1, 256], strides = [1, 1]} : vector<8x256xf32> to vector<1x256xf32>
    %61 = vector.broadcast %59 : vector<8x1xf32> to vector<8x256xf32>
    %62 = vector.broadcast %60 : vector<1x256xf32> to vector<8x256xf32>
    %63 = arith.mulf %61, %62 : vector<8x256xf32>
    %64 = arith.addf %58, %63 : vector<8x256xf32>
    %65 = vector.extract_strided_slice %3 {offsets = [0, 3], sizes = [8, 1], strides = [1, 1]} : vector<8x8xf32> to vector<8x1xf32>
    %66 = vector.extract_strided_slice %47 {offsets = [3, 0], sizes = [1, 256], strides = [1, 1]} : vector<8x256xf32> to vector<1x256xf32>
    %67 = vector.broadcast %65 : vector<8x1xf32> to vector<8x256xf32>
    %68 = vector.broadcast %66 : vector<1x256xf32> to vector<8x256xf32>
    %69 = arith.mulf %67, %68 : vector<8x256xf32>
    %70 = arith.addf %64, %69 : vector<8x256xf32>
    %71 = vector.extract_strided_slice %3 {offsets = [0, 4], sizes = [8, 1], strides = [1, 1]} : vector<8x8xf32> to vector<8x1xf32>
    %72 = vector.extract_strided_slice %47 {offsets = [4, 0], sizes = [1, 256], strides = [1, 1]} : vector<8x256xf32> to vector<1x256xf32>
    %73 = vector.broadcast %71 : vector<8x1xf32> to vector<8x256xf32>
    %74 = vector.broadcast %72 : vector<1x256xf32> to vector<8x256xf32>
    %75 = arith.mulf %73, %74 : vector<8x256xf32>
    %76 = arith.addf %70, %75 : vector<8x256xf32>
    %77 = vector.extract_strided_slice %3 {offsets = [0, 5], sizes = [8, 1], strides = [1, 1]} : vector<8x8xf32> to vector<8x1xf32>
    %78 = vector.extract_strided_slice %47 {offsets = [5, 0], sizes = [1, 256], strides = [1, 1]} : vector<8x256xf32> to vector<1x256xf32>
    %79 = vector.broadcast %77 : vector<8x1xf32> to vector<8x256xf32>
    %80 = vector.broadcast %78 : vector<1x256xf32> to vector<8x256xf32>
    %81 = arith.mulf %79, %80 : vector<8x256xf32>
    %82 = arith.addf %76, %81 : vector<8x256xf32>
    %83 = vector.extract_strided_slice %3 {offsets = [0, 6], sizes = [8, 1], strides = [1, 1]} : vector<8x8xf32> to vector<8x1xf32>
    %84 = vector.extract_strided_slice %47 {offsets = [6, 0], sizes = [1, 256], strides = [1, 1]} : vector<8x256xf32> to vector<1x256xf32>
    %85 = vector.broadcast %83 : vector<8x1xf32> to vector<8x256xf32>
    %86 = vector.broadcast %84 : vector<1x256xf32> to vector<8x256xf32>
    %87 = arith.mulf %85, %86 : vector<8x256xf32>
    %88 = arith.addf %82, %87 : vector<8x256xf32>
    %89 = vector.extract_strided_slice %3 {offsets = [0, 7], sizes = [8, 1], strides = [1, 1]} : vector<8x8xf32> to vector<8x1xf32>
    %90 = vector.extract_strided_slice %47 {offsets = [7, 0], sizes = [1, 256], strides = [1, 1]} : vector<8x256xf32> to vector<1x256xf32>
    %91 = vector.broadcast %89 : vector<8x1xf32> to vector<8x256xf32>
    %92 = vector.broadcast %90 : vector<1x256xf32> to vector<8x256xf32>
    %93 = arith.mulf %91, %92 : vector<8x256xf32>
    %94 = arith.addf %88, %93 : vector<8x256xf32>
    %cst_24 = arith.constant dense<0.000000e+00> : vector<8xf32>
    %95 = vector.multi_reduction <add>, %94, %cst_24 [1] : vector<8x256xf32> to vector<8xf32>
    %96 = vector.shape_cast %95 : vector<8xf32> to vector<8x1xf32>
    %97 = arith.mulf %94, %94 : vector<8x256xf32>
    %cst_25 = arith.constant dense<0.000000e+00> : vector<8xf32>
    %98 = vector.multi_reduction <add>, %97, %cst_25 [1] : vector<8x256xf32> to vector<8xf32>
    %99 = vector.shape_cast %98 : vector<8xf32> to vector<8x1xf32>
    %c4_i32 = arith.constant 4 : i32
    %100 = tpu.dynamic_rotate %96 by %c4_i32 dim 0 : vector<8x1xf32>, i32 -> vector<8x1xf32>
    %101 = arith.addf %96, %100 : vector<8x1xf32>
    %c4_i32_26 = arith.constant 4 : i32
    %102 = tpu.dynamic_rotate %99 by %c4_i32_26 dim 0 : vector<8x1xf32>, i32 -> vector<8x1xf32>
    %103 = arith.addf %99, %102 : vector<8x1xf32>
    %cst_27 = arith.constant 0.001953125 : f32
    %104 = vector.broadcast %cst_27 : f32 to vector<8x1xf32>
    %105 = arith.mulf %101, %104 : vector<8x1xf32>
    %cst_28 = arith.constant 0.001953125 : f32
    %106 = vector.broadcast %cst_28 : f32 to vector<8x1xf32>
    %107 = arith.mulf %103, %106 : vector<8x1xf32>
    %108 = arith.mulf %105, %105 : vector<8x1xf32>
    %109 = arith.subf %107, %108 : vector<8x1xf32>
    %cst_29 = arith.constant 0.000000e+00 : f32
    %110 = vector.broadcast %cst_29 : f32 to vector<8x1xf32>
    %111 = arith.maximumf %109, %110 : vector<8x1xf32>
    %112 = vector.broadcast %105 : vector<8x1xf32> to vector<8x256xf32>
    %113 = arith.subf %94, %112 : vector<8x256xf32>
    %cst_30 = arith.constant 9.99999974E-6 : f32
    %114 = vector.broadcast %cst_30 : f32 to vector<8x1xf32>
    %115 = arith.addf %111, %114 : vector<8x1xf32>
    %116 = math.rsqrt %115 : vector<8x1xf32>
    %117 = vector.broadcast %116 : vector<8x1xf32> to vector<8x256xf32>
    %118 = arith.mulf %113, %117 : vector<8x256xf32>
    %cst_31 = arith.constant 0.000000e+00 : f32
    %119 = vector.broadcast %cst_31 : f32 to vector<8x256xf32>
    %120 = arith.maximumf %118, %119 : vector<8x256xf32>
    %c17_i32_32 = arith.constant 17 : i32
    %121 = tpu.dynamic_rotate %120 by %c17_i32_32 dim 1 : vector<8x256xf32>, i32 -> vector<8x256xf32>
    %c9 = arith.constant 9 : index
    %c0_33 = arith.constant 0 : index
    %c0_34 = arith.constant 0 : index
    %122 = vector.load %arg1[%c9, %c0_33, %c0_34] : memref<18x8x256xf32, #tpu.memory_space<vmem>>, vector<1x8x256xf32>
    %123 = vector.shape_cast %122 : vector<1x8x256xf32> to vector<8x256xf32>
    %124 = arith.mulf %121, %123 : vector<8x256xf32>
    %c16_i32_35 = arith.constant 16 : i32
    %125 = tpu.dynamic_rotate %120 by %c16_i32_35 dim 1 : vector<8x256xf32>, i32 -> vector<8x256xf32>
    %c10 = arith.constant 10 : index
    %c0_36 = arith.constant 0 : index
    %c0_37 = arith.constant 0 : index
    %126 = vector.load %arg1[%c10, %c0_36, %c0_37] : memref<18x8x256xf32, #tpu.memory_space<vmem>>, vector<1x8x256xf32>
    %127 = vector.shape_cast %126 : vector<1x8x256xf32> to vector<8x256xf32>
    %128 = arith.mulf %125, %127 : vector<8x256xf32>
    %129 = arith.addf %124, %128 : vector<8x256xf32>
    %c15_i32_38 = arith.constant 15 : i32
    %130 = tpu.dynamic_rotate %120 by %c15_i32_38 dim 1 : vector<8x256xf32>, i32 -> vector<8x256xf32>
    %c11 = arith.constant 11 : index
    %c0_39 = arith.constant 0 : index
    %c0_40 = arith.constant 0 : index
    %131 = vector.load %arg1[%c11, %c0_39, %c0_40] : memref<18x8x256xf32, #tpu.memory_space<vmem>>, vector<1x8x256xf32>
    %132 = vector.shape_cast %131 : vector<1x8x256xf32> to vector<8x256xf32>
    %133 = arith.mulf %130, %132 : vector<8x256xf32>
    %134 = arith.addf %129, %133 : vector<8x256xf32>
    %c1_i32_41 = arith.constant 1 : i32
    %135 = tpu.dynamic_rotate %120 by %c1_i32_41 dim 1 : vector<8x256xf32>, i32 -> vector<8x256xf32>
    %c12 = arith.constant 12 : index
    %c0_42 = arith.constant 0 : index
    %c0_43 = arith.constant 0 : index
    %136 = vector.load %arg1[%c12, %c0_42, %c0_43] : memref<18x8x256xf32, #tpu.memory_space<vmem>>, vector<1x8x256xf32>
    %137 = vector.shape_cast %136 : vector<1x8x256xf32> to vector<8x256xf32>
    %138 = arith.mulf %135, %137 : vector<8x256xf32>
    %139 = arith.addf %134, %138 : vector<8x256xf32>
    %c13 = arith.constant 13 : index
    %c0_44 = arith.constant 0 : index
    %c0_45 = arith.constant 0 : index
    %140 = vector.load %arg1[%c13, %c0_44, %c0_45] : memref<18x8x256xf32, #tpu.memory_space<vmem>>, vector<1x8x256xf32>
    %141 = vector.shape_cast %140 : vector<1x8x256xf32> to vector<8x256xf32>
    %142 = arith.mulf %120, %141 : vector<8x256xf32>
    %143 = arith.addf %139, %142 : vector<8x256xf32>
    %c255_i32_46 = arith.constant 255 : i32
    %144 = tpu.dynamic_rotate %120 by %c255_i32_46 dim 1 : vector<8x256xf32>, i32 -> vector<8x256xf32>
    %c14 = arith.constant 14 : index
    %c0_47 = arith.constant 0 : index
    %c0_48 = arith.constant 0 : index
    %145 = vector.load %arg1[%c14, %c0_47, %c0_48] : memref<18x8x256xf32, #tpu.memory_space<vmem>>, vector<1x8x256xf32>
    %146 = vector.shape_cast %145 : vector<1x8x256xf32> to vector<8x256xf32>
    %147 = arith.mulf %144, %146 : vector<8x256xf32>
    %148 = arith.addf %143, %147 : vector<8x256xf32>
    %c241_i32_49 = arith.constant 241 : i32
    %149 = tpu.dynamic_rotate %120 by %c241_i32_49 dim 1 : vector<8x256xf32>, i32 -> vector<8x256xf32>
    %c15 = arith.constant 15 : index
    %c0_50 = arith.constant 0 : index
    %c0_51 = arith.constant 0 : index
    %150 = vector.load %arg1[%c15, %c0_50, %c0_51] : memref<18x8x256xf32, #tpu.memory_space<vmem>>, vector<1x8x256xf32>
    %151 = vector.shape_cast %150 : vector<1x8x256xf32> to vector<8x256xf32>
    %152 = arith.mulf %149, %151 : vector<8x256xf32>
    %153 = arith.addf %148, %152 : vector<8x256xf32>
    %c240_i32_52 = arith.constant 240 : i32
    %154 = tpu.dynamic_rotate %120 by %c240_i32_52 dim 1 : vector<8x256xf32>, i32 -> vector<8x256xf32>
    %c16 = arith.constant 16 : index
    %c0_53 = arith.constant 0 : index
    %c0_54 = arith.constant 0 : index
    %155 = vector.load %arg1[%c16, %c0_53, %c0_54] : memref<18x8x256xf32, #tpu.memory_space<vmem>>, vector<1x8x256xf32>
    %156 = vector.shape_cast %155 : vector<1x8x256xf32> to vector<8x256xf32>
    %157 = arith.mulf %154, %156 : vector<8x256xf32>
    %158 = arith.addf %153, %157 : vector<8x256xf32>
    %c239_i32_55 = arith.constant 239 : i32
    %159 = tpu.dynamic_rotate %120 by %c239_i32_55 dim 1 : vector<8x256xf32>, i32 -> vector<8x256xf32>
    %c17 = arith.constant 17 : index
    %c0_56 = arith.constant 0 : index
    %c0_57 = arith.constant 0 : index
    %160 = vector.load %arg1[%c17, %c0_56, %c0_57] : memref<18x8x256xf32, #tpu.memory_space<vmem>>, vector<1x8x256xf32>
    %161 = vector.shape_cast %160 : vector<1x8x256xf32> to vector<8x256xf32>
    %162 = arith.mulf %159, %161 : vector<8x256xf32>
    %163 = arith.addf %158, %162 : vector<8x256xf32>
    %164 = vector.extract_strided_slice %4 {offsets = [0, 0], sizes = [16, 1], strides = [1, 1]} : vector<16x8xf32> to vector<16x1xf32>
    %165 = vector.extract_strided_slice %163 {offsets = [0, 0], sizes = [1, 256], strides = [1, 1]} : vector<8x256xf32> to vector<1x256xf32>
    %166 = vector.broadcast %164 : vector<16x1xf32> to vector<16x256xf32>
    %167 = vector.broadcast %165 : vector<1x256xf32> to vector<16x256xf32>
    %168 = arith.mulf %166, %167 : vector<16x256xf32>
    %169 = vector.extract_strided_slice %4 {offsets = [0, 1], sizes = [16, 1], strides = [1, 1]} : vector<16x8xf32> to vector<16x1xf32>
    %170 = vector.extract_strided_slice %163 {offsets = [1, 0], sizes = [1, 256], strides = [1, 1]} : vector<8x256xf32> to vector<1x256xf32>
    %171 = vector.broadcast %169 : vector<16x1xf32> to vector<16x256xf32>
    %172 = vector.broadcast %170 : vector<1x256xf32> to vector<16x256xf32>
    %173 = arith.mulf %171, %172 : vector<16x256xf32>
    %174 = arith.addf %168, %173 : vector<16x256xf32>
    %175 = vector.extract_strided_slice %4 {offsets = [0, 2], sizes = [16, 1], strides = [1, 1]} : vector<16x8xf32> to vector<16x1xf32>
    %176 = vector.extract_strided_slice %163 {offsets = [2, 0], sizes = [1, 256], strides = [1, 1]} : vector<8x256xf32> to vector<1x256xf32>
    %177 = vector.broadcast %175 : vector<16x1xf32> to vector<16x256xf32>
    %178 = vector.broadcast %176 : vector<1x256xf32> to vector<16x256xf32>
    %179 = arith.mulf %177, %178 : vector<16x256xf32>
    %180 = arith.addf %174, %179 : vector<16x256xf32>
    %181 = vector.extract_strided_slice %4 {offsets = [0, 3], sizes = [16, 1], strides = [1, 1]} : vector<16x8xf32> to vector<16x1xf32>
    %182 = vector.extract_strided_slice %163 {offsets = [3, 0], sizes = [1, 256], strides = [1, 1]} : vector<8x256xf32> to vector<1x256xf32>
    %183 = vector.broadcast %181 : vector<16x1xf32> to vector<16x256xf32>
    %184 = vector.broadcast %182 : vector<1x256xf32> to vector<16x256xf32>
    %185 = arith.mulf %183, %184 : vector<16x256xf32>
    %186 = arith.addf %180, %185 : vector<16x256xf32>
    %187 = vector.extract_strided_slice %4 {offsets = [0, 4], sizes = [16, 1], strides = [1, 1]} : vector<16x8xf32> to vector<16x1xf32>
    %188 = vector.extract_strided_slice %163 {offsets = [4, 0], sizes = [1, 256], strides = [1, 1]} : vector<8x256xf32> to vector<1x256xf32>
    %189 = vector.broadcast %187 : vector<16x1xf32> to vector<16x256xf32>
    %190 = vector.broadcast %188 : vector<1x256xf32> to vector<16x256xf32>
    %191 = arith.mulf %189, %190 : vector<16x256xf32>
    %192 = arith.addf %186, %191 : vector<16x256xf32>
    %193 = vector.extract_strided_slice %4 {offsets = [0, 5], sizes = [16, 1], strides = [1, 1]} : vector<16x8xf32> to vector<16x1xf32>
    %194 = vector.extract_strided_slice %163 {offsets = [5, 0], sizes = [1, 256], strides = [1, 1]} : vector<8x256xf32> to vector<1x256xf32>
    %195 = vector.broadcast %193 : vector<16x1xf32> to vector<16x256xf32>
    %196 = vector.broadcast %194 : vector<1x256xf32> to vector<16x256xf32>
    %197 = arith.mulf %195, %196 : vector<16x256xf32>
    %198 = arith.addf %192, %197 : vector<16x256xf32>
    %199 = vector.extract_strided_slice %4 {offsets = [0, 6], sizes = [16, 1], strides = [1, 1]} : vector<16x8xf32> to vector<16x1xf32>
    %200 = vector.extract_strided_slice %163 {offsets = [6, 0], sizes = [1, 256], strides = [1, 1]} : vector<8x256xf32> to vector<1x256xf32>
    %201 = vector.broadcast %199 : vector<16x1xf32> to vector<16x256xf32>
    %202 = vector.broadcast %200 : vector<1x256xf32> to vector<16x256xf32>
    %203 = arith.mulf %201, %202 : vector<16x256xf32>
    %204 = arith.addf %198, %203 : vector<16x256xf32>
    %205 = vector.extract_strided_slice %4 {offsets = [0, 7], sizes = [16, 1], strides = [1, 1]} : vector<16x8xf32> to vector<16x1xf32>
    %206 = vector.extract_strided_slice %163 {offsets = [7, 0], sizes = [1, 256], strides = [1, 1]} : vector<8x256xf32> to vector<1x256xf32>
    %207 = vector.broadcast %205 : vector<16x1xf32> to vector<16x256xf32>
    %208 = vector.broadcast %206 : vector<1x256xf32> to vector<16x256xf32>
    %209 = arith.mulf %207, %208 : vector<16x256xf32>
    %210 = arith.addf %204, %209 : vector<16x256xf32>
    %cst_58 = arith.constant dense<0.000000e+00> : vector<16xf32>
    %211 = vector.multi_reduction <add>, %210, %cst_58 [1] : vector<16x256xf32> to vector<16xf32>
    %212 = vector.shape_cast %211 : vector<16xf32> to vector<16x1xf32>
    %213 = arith.mulf %210, %210 : vector<16x256xf32>
    %cst_59 = arith.constant dense<0.000000e+00> : vector<16xf32>
    %214 = vector.multi_reduction <add>, %213, %cst_59 [1] : vector<16x256xf32> to vector<16xf32>
    %215 = vector.shape_cast %214 : vector<16xf32> to vector<16x1xf32>
    %c8_i32 = arith.constant 8 : i32
    %216 = tpu.dynamic_rotate %212 by %c8_i32 dim 0 : vector<16x1xf32>, i32 -> vector<16x1xf32>
    %217 = arith.addf %212, %216 : vector<16x1xf32>
    %c8_i32_60 = arith.constant 8 : i32
    %218 = tpu.dynamic_rotate %215 by %c8_i32_60 dim 0 : vector<16x1xf32>, i32 -> vector<16x1xf32>
    %219 = arith.addf %215, %218 : vector<16x1xf32>
    %cst_61 = arith.constant 0.001953125 : f32
    %220 = vector.broadcast %cst_61 : f32 to vector<16x1xf32>
    %221 = arith.mulf %217, %220 : vector<16x1xf32>
    %cst_62 = arith.constant 0.001953125 : f32
    %222 = vector.broadcast %cst_62 : f32 to vector<16x1xf32>
    %223 = arith.mulf %219, %222 : vector<16x1xf32>
    %224 = arith.mulf %221, %221 : vector<16x1xf32>
    %225 = arith.subf %223, %224 : vector<16x1xf32>
    %cst_63 = arith.constant 0.000000e+00 : f32
    %226 = vector.broadcast %cst_63 : f32 to vector<16x1xf32>
    %227 = arith.maximumf %225, %226 : vector<16x1xf32>
    %228 = vector.broadcast %221 : vector<16x1xf32> to vector<16x256xf32>
    %229 = arith.subf %210, %228 : vector<16x256xf32>
    %cst_64 = arith.constant 9.99999974E-6 : f32
    %230 = vector.broadcast %cst_64 : f32 to vector<16x1xf32>
    %231 = arith.addf %227, %230 : vector<16x1xf32>
    %232 = math.rsqrt %231 : vector<16x1xf32>
    %233 = vector.broadcast %232 : vector<16x1xf32> to vector<16x256xf32>
    %234 = arith.mulf %229, %233 : vector<16x256xf32>
    %c0_65 = arith.constant 0 : index
    %c0_66 = arith.constant 0 : index
    %235 = vector.load %arg3[%c0_65, %c0_66] : memref<16x256xf32, #tpu.memory_space<vmem>>, vector<16x256xf32>
    tpu.vector_store %arg3[%c0_65, %c0_66], %234 {strides = array<i32>} : memref<16x256xf32, #tpu.memory_space<vmem>>, vector<16x256xf32>,
    return
  }
}

</mosaic_0001>

<llo_original>
// kernel: new_mixed_op.1
$region0: #{new_mixed_op.1}
  #allocation0 [shape = 'u32[]', space=smem, size = 0x4, offset = 0x4, fixed_abs, tag = 'smem constant byte address 0x4 - core index']
  #allocation1 [shape = 'u32[72,128]{1,0:T(1,128)}', space=vmem, size = 0x9000, scoped, tag = 'internal scratch']
  %s0 = inlined_call_operand.vmem [shape: f32[8,256], index: 0, kind: input, shape index: {}]
  %s1 = inlined_call_operand.vmem [shape: f32[18,8,256], index: 1, kind: input, shape index: {}]
  %s2 = inlined_call_operand.vmem [shape: f32[24,8], index: 2, kind: input, shape index: {}]
  %s3 = inlined_call_operand.vmem [shape: f32[16,256], index: 3, kind: output, shape index: {}]
  %s4 = sld [smem:[#allocation0]]
  $region22: #{new_mixed_op.1} parent=0
    _
  %s6 = ssub.s32 1, %s4
  %s7 = scalar_select 0, %s6, %s4
  // Predicated region
  $region2: #{new_mixed_op.1} parent=0 // pred_check
    _
  $region3: #{new_mixed_op.1} parent=0 // pred_check_branch
    %9 = sbr.rel (0) target = $region5
  $region4: #{new_mixed_op.1} parent=0 // pred_region
    _
  $region5: #{new_mixed_op.1} parent=0 // pred_fallthru
    _
  // Predicated region
  $region6: #{new_mixed_op.1} parent=0 // pred_check
    _
  $region7: #{new_mixed_op.1} parent=0 // pred_check_branch
    %11 = sbr.rel (0) target = $region9
  $region8: #{new_mixed_op.1} parent=0 // pred_region
    _
  $region9: #{new_mixed_op.1} parent=0 // pred_fallthru
    _
  // Predicated region
  $region10: #{new_mixed_op.1} parent=0 // pred_check
    _
  $region11: #{new_mixed_op.1} parent=0 // pred_check_branch
    %13 = sbr.rel (0) target = $region13
  $region12: #{new_mixed_op.1} parent=0 // pred_region
    _
  $region13: #{new_mixed_op.1} parent=0 // pred_fallthru
    _
  %v14 = vld [vmem:[%s0] sm:$0xff]
  %v15 = vld [vmem:[%s0 + $0x8] sm:$0xff]
  %v16 = vmax.f32 %v14, 0.0
  %v17 = vmax.f32 %v15, 0.0
  %v18 = vld [vmem:[%s2] sm:$0xff]
  %v19 = vld [vmem:[%s2 + $0x8] sm:$0xff]
  %v20 = vld [vmem:[%s2 + $0x10] sm:$0xff]
  %21 = vrot.lane.b32.xlu0 %v16, 17
  %v22 = vpop.permute.xlu0 %21
  %23 = vrot.lane.b32.xlu0 %v17, 17
  %v24 = vpop.permute.xlu0 %23
  %v25 = vlaneseq
  %v26 = vand.u32 %v25, 127
  %vm27 = vcmp.lt.s32.totalorder %v26, 17
  %v28 = vsel %vm27, %v22, %v24
  %v29 = vsel %vm27, %v24, %v22
  %v30 = vld [vmem:[%s1] sm:$0xff]
  %v31 = vld [vmem:[%s1 + $0x8] sm:$0xff]
  %v32 = vmul.f32 %v29, %v30
  %v33 = vmul.f32 %v28, %v31
  %34 = vrot.lane.b32.xlu0 %v16, 16
  %v35 = vpop.permute.xlu0 %34
  %36 = vrot.lane.b32.xlu0 %v17, 16
  %v37 = vpop.permute.xlu0 %36
  %vm38 = vcmp.lt.s32.totalorder %v26, 16
  %v39 = vsel %vm38, %v35, %v37
  %v40 = vsel %vm38, %v37, %v35
  %s41 = scalar_lea.vmem %s1, 16
  %v42 = vld [vmem:[%s41] sm:$0xff]
  %v43 = vld [vmem:[%s41 + $0x8] sm:$0xff]
  %v44 = vmul.f32 %v40, %v42
  %v45 = vmul.f32 %v39, %v43
  %v46 = vadd.f32 %v32, %v44
  %v47 = vadd.f32 %v33, %v45
  %48 = vrot.lane.b32.xlu0 %v16, 15
  %v49 = vpop.permute.xlu0 %48
  %50 = vrot.lane.b32.xlu0 %v17, 15
  %v51 = vpop.permute.xlu0 %50
  %vm52 = vcmp.lt.s32.totalorder %v26, 15
  %v53 = vsel %vm52, %v49, %v51
  %v54 = vsel %vm52, %v51, %v49
  %s55 = scalar_lea.vmem %s1, 32
  %v56 = vld [vmem:[%s55] sm:$0xff]
  %v57 = vld [vmem:[%s55 + $0x8] sm:$0xff]
  %v58 = vmul.f32 %v54, %v56
  %v59 = vmul.f32 %v53, %v57
  %v60 = vadd.f32 %v46, %v58
  %v61 = vadd.f32 %v47, %v59
  %62 = vrot.lane.b32.xlu0 %v16, 1
  %v63 = vpop.permute.xlu0 %62
  %64 = vrot.lane.b32.xlu0 %v17, 1
  %v65 = vpop.permute.xlu0 %64
  %vm66 = vcmp.lt.s32.totalorder %v26, 1
  %v67 = vsel %vm66, %v63, %v65
  %v68 = vsel %vm66, %v65, %v63
  %s69 = scalar_lea.vmem %s1, 48
  %v70 = vld [vmem:[%s69] sm:$0xff]
  %v71 = vld [vmem:[%s69 + $0x8] sm:$0xff]
  %v72 = vmul.f32 %v68, %v70
  %v73 = vmul.f32 %v67, %v71
  %v74 = vadd.f32 %v60, %v72
  %v75 = vadd.f32 %v61, %v73
  %s76 = scalar_lea.vmem %s1, 64
  %v77 = vld [vmem:[%s76] sm:$0xff]
  %v78 = vld [vmem:[%s76 + $0x8] sm:$0xff]
  %v79 = vmul.f32 %v16, %v77
  %v80 = vmul.f32 %v17, %v78
  %v81 = vadd.f32 %v74, %v79
  %v82 = vadd.f32 %v75, %v80
  %83 = vrot.lane.b32.xlu0 %v16, 127
  %v84 = vpop.permute.xlu0 %83
  %85 = vrot.lane.b32.xlu0 %v17, 127
  %v86 = vpop.permute.xlu0 %85
  %vm87 = vcmp.lt.s32.totalorder %v26, 127
  %v88 = vsel %vm87, %v84, %v86
  %v89 = vsel %vm87, %v86, %v84
  %s90 = scalar_lea.vmem %s1, 80
  %v91 = vld [vmem:[%s90] sm:$0xff]
  %v92 = vld [vmem:[%s90 + $0x8] sm:$0xff]
  %v93 = vmul.f32 %v88, %v91
  %v94 = vmul.f32 %v89, %v92
  %v95 = vadd.f32 %v81, %v93
  %v96 = vadd.f32 %v82, %v94
  %97 = vrot.lane.b32.xlu0 %v16, 113
  %v98 = vpop.permute.xlu0 %97
  %99 = vrot.lane.b32.xlu0 %v17, 113
  %v100 = vpop.permute.xlu0 %99
  %vm101 = vcmp.lt.s32.totalorder %v26, 113
  %v102 = vsel %vm101, %v98, %v100
  %v103 = vsel %vm101, %v100, %v98
  %s104 = scalar_lea.vmem %s1, 96
  %v105 = vld [vmem:[%s104] sm:$0xff]
  %v106 = vld [vmem:[%s104 + $0x8] sm:$0xff]
  %v107 = vmul.f32 %v102, %v105
  %v108 = vmul.f32 %v103, %v106
  %v109 = vadd.f32 %v95, %v107
  %v110 = vadd.f32 %v96, %v108
  %111 = vrot.lane.b32.xlu0 %v16, 112
  %v112 = vpop.permute.xlu0 %111
  %113 = vrot.lane.b32.xlu0 %v17, 112
  %v114 = vpop.permute.xlu0 %113
  %vm115 = vcmp.lt.s32.totalorder %v26, 112
  %v116 = vsel %vm115, %v112, %v114
  %v117 = vsel %vm115, %v114, %v112
  %s118 = scalar_lea.vmem %s1, 112
  %v119 = vld [vmem:[%s118] sm:$0xff]
  %v120 = vld [vmem:[%s118 + $0x8] sm:$0xff]
  %v121 = vmul.f32 %v116, %v119
  %v122 = vmul.f32 %v117, %v120
  %v123 = vadd.f32 %v109, %v121
  %v124 = vadd.f32 %v110, %v122
  %125 = vrot.lane.b32.xlu0 %v16, 111
  %v126 = vpop.permute.xlu0 %125
  %127 = vrot.lane.b32.xlu0 %v17, 111
  %v128 = vpop.permute.xlu0 %127
  %vm129 = vcmp.lt.s32.totalorder %v26, 111
  %v130 = vsel %vm129, %v126, %v128
  %v131 = vsel %vm129, %v128, %v126
  %s132 = scalar_lea.vmem %s1, 128
  %v133 = vld [vmem:[%s132] sm:$0xff]
  %v134 = vld [vmem:[%s132 + $0x8] sm:$0xff]
  %v135 = vmul.f32 %v130, %v133
  %v136 = vmul.f32 %v131, %v134
  %v137 = vadd.f32 %v123, %v135
  %v138 = vadd.f32 %v124, %v136
  %140 = vset.pattern.permute.xlu0 0
  %141 = vperm.xlu0 %140, %v18
  %v142 = vpop.permute.xlu0 %141
  %v144 = vperm.slane %v137, 0
  %v145 = vperm.slane %v138, 0
  %v146 = vmul.f32 %v142, %v144
  %v147 = vmul.f32 %v142, %v145
  %148 = vset.pattern.permute.xlu0 1
  %149 = vperm.xlu0 %148, %v18
  %v150 = vpop.permute.xlu0 %149
  %v152 = vperm.slane %v137, 1
  %v153 = vperm.slane %v138, 1
  %v154 = vmul.f32 %v150, %v152
  %v155 = vmul.f32 %v150, %v153
  %v156 = vadd.f32 %v146, %v154
  %v157 = vadd.f32 %v147, %v155
  %158 = vset.pattern.permute.xlu0 2
  %159 = vperm.xlu0 %158, %v18
  %v160 = vpop.permute.xlu0 %159
  %v162 = vperm.slane %v137, 2
  %v163 = vperm.slane %v138, 2
  %v164 = vmul.f32 %v160, %v162
  %v165 = vmul.f32 %v160, %v163
  %v166 = vadd.f32 %v156, %v164
  %v167 = vadd.f32 %v157, %v165
  %168 = vset.pattern.permute.xlu0 3
  %169 = vperm.xlu0 %168, %v18
  %v170 = vpop.permute.xlu0 %169
  %v172 = vperm.slane %v137, 3
  %v173 = vperm.slane %v138, 3
  %v174 = vmul.f32 %v170, %v172
  %v175 = vmul.f32 %v170, %v173
  %v176 = vadd.f32 %v166, %v174
  %v177 = vadd.f32 %v167, %v175
  %178 = vset.pattern.permute.xlu0 4
  %179 = vperm.xlu0 %178, %v18
  %v180 = vpop.permute.xlu0 %179
  %v182 = vperm.slane %v137, 4
  %v183 = vperm.slane %v138, 4
  %v184 = vmul.f32 %v180, %v182
  %v185 = vmul.f32 %v180, %v183
  %v186 = vadd.f32 %v176, %v184
  %v187 = vadd.f32 %v177, %v185
  %188 = vset.pattern.permute.xlu0 5
  %189 = vperm.xlu0 %188, %v18
  %v190 = vpop.permute.xlu0 %189
  %v192 = vperm.slane %v137, 5
  %v193 = vperm.slane %v138, 5
  %v194 = vmul.f32 %v190, %v192
  %v195 = vmul.f32 %v190, %v193
  %v196 = vadd.f32 %v186, %v194
  %v197 = vadd.f32 %v187, %v195
  %198 = vset.pattern.permute.xlu0 6
  %199 = vperm.xlu0 %198, %v18
  %v200 = vpop.permute.xlu0 %199
  %v202 = vperm.slane %v137, 6
  %v203 = vperm.slane %v138, 6
  %v204 = vmul.f32 %v200, %v202
  %v205 = vmul.f32 %v200, %v203
  %v206 = vadd.f32 %v196, %v204
  %v207 = vadd.f32 %v197, %v205
  %208 = vset.pattern.permute.xlu0 7
  %209 = vperm.xlu0 %208, %v18
  %v210 = vpop.permute.xlu0 %209
  %v212 = vperm.slane %v137, 7
  %v213 = vperm.slane %v138, 7
  %v214 = vmul.f32 %v210, %v212
  %v215 = vmul.f32 %v210, %v213
  %v216 = vadd.f32 %v206, %v214
  %v217 = vadd.f32 %v207, %v215
  %v218 = vadd.f32 %v216, %v217
  %219 = vadd.xlane.f32.xlu0 %v218
  %v220 = vpop.xlane.xlu0 %219
  %v221 = vmul.f32 %v216, %v216
  %v222 = vmul.f32 %v217, %v217
  %v223 = vadd.f32 %v221, %v222
  %224 = vadd.xlane.f32.xlu0 %v223
  %v225 = vpop.xlane.xlu0 %224
  %v226 = vrot.slane %v220, 4
  %v227 = vadd.f32 %v220, %v226
  %v228 = vrot.slane %v225, 4
  %v229 = vadd.f32 %v225, %v228
  %v230 = vmul.f32 %v227, 0.001953125
  %v231 = vmul.f32 %v229, 0.001953125
  %v232 = vmul.f32 %v230, %v230
  %v233 = vsub.f32 %v231, %v232
  %v234 = vmax.f32 %v233, 0.0
  %236 = vset.pattern.permute.xlu0 0
  %237 = vperm.xlu0 %236, %v230
  %v238 = vpop.permute.xlu0 %237
  %v240 = vsub.f32 %v216, %v238
  %v241 = vsub.f32 %v217, %v238
  %v242 = vadd.f32 %v234, 1e-05
  %v243 = vrsqrt.pop %v242
  %v244 = vmul.f32 %v243, %v242
  %v245 = vmul.f32 %v244, %v243
  %v246 = vmul.f32 0.5, %v245
  %v247 = vsub.f32 1.5, %v246
  %v248 = vmul.f32 %v243, %v247
  %vm249 = vweird.f32 %v242
  %vm250 = vweird.f32 %v243
  %vm251 = vmor %vm249, %vm250
  %v252 = vsel %vm251, %v243, %v248
  %254 = vset.pattern.permute.xlu0 0
  %255 = vperm.xlu0 %254, %v252
  %v256 = vpop.permute.xlu0 %255
  %v258 = vmul.f32 %v240, %v256
  %v259 = vmul.f32 %v241, %v256
  %v260 = vmax.f32 %v258, 0.0
  %v261 = vmax.f32 %v259, 0.0
  %262 = vrot.lane.b32.xlu0 %v260, 17
  %v263 = vpop.permute.xlu0 %262
  %264 = vrot.lane.b32.xlu0 %v261, 17
  %v265 = vpop.permute.xlu0 %264
  %v266 = vsel %vm27, %v263, %v265
  %v267 = vsel %vm27, %v265, %v263
  %s268 = scalar_lea.vmem %s1, 144
  %v269 = vld [vmem:[%s268] sm:$0xff]
  %v270 = vld [vmem:[%s268 + $0x8] sm:$0xff]
  %v271 = vmul.f32 %v267, %v269
  %v272 = vmul.f32 %v266, %v270
  %273 = vrot.lane.b32.xlu0 %v260, 16
  %v274 = vpop.permute.xlu0 %273
  %275 = vrot.lane.b32.xlu0 %v261, 16
  %v276 = vpop.permute.xlu0 %275
  %v277 = vsel %vm38, %v274, %v276
  %v278 = vsel %vm38, %v276, %v274
  %s279 = scalar_lea.vmem %s1, 160
  %v280 = vld [vmem:[%s279] sm:$0xff]
  %v281 = vld [vmem:[%s279 + $0x8] sm:$0xff]
  %v282 = vmul.f32 %v278, %v280
  %v283 = vmul.f32 %v277, %v281
  %v284 = vadd.f32 %v271, %v282
  %v285 = vadd.f32 %v272, %v283
  %286 = vrot.lane.b32.xlu0 %v260, 15
  %v287 = vpop.permute.xlu0 %286
  %288 = vrot.lane.b32.xlu0 %v261, 15
  %v289 = vpop.permute.xlu0 %288
  %v290 = vsel %vm52, %v287, %v289
  %v291 = vsel %vm52, %v289, %v287
  %s292 = scalar_lea.vmem %s1, 176
  %v293 = vld [vmem:[%s292] sm:$0xff]
  %v294 = vld [vmem:[%s292 + $0x8] sm:$0xff]
  %v295 = vmul.f32 %v291, %v293
  %v296 = vmul.f32 %v290, %v294
  %v297 = vadd.f32 %v284, %v295
  %v298 = vadd.f32 %v285, %v296
  %299 = vrot.lane.b32.xlu0 %v260, 1
  %v300 = vpop.permute.xlu0 %299
  %301 = vrot.lane.b32.xlu0 %v261, 1
  %v302 = vpop.permute.xlu0 %301
  %v303 = vsel %vm66, %v300, %v302
  %v304 = vsel %vm66, %v302, %v300
  %s305 = scalar_lea.vmem %s1, 192
  %v306 = vld [vmem:[%s305] sm:$0xff]
  %v307 = vld [vmem:[%s305 + $0x8] sm:$0xff]
  %v308 = vmul.f32 %v304, %v306
  %v309 = vmul.f32 %v303, %v307
  %v310 = vadd.f32 %v297, %v308
  %v311 = vadd.f32 %v298, %v309
  %s312 = scalar_lea.vmem %s1, 208
  %v313 = vld [vmem:[%s312] sm:$0xff]
  %v314 = vld [vmem:[%s312 + $0x8] sm:$0xff]
  %v315 = vmul.f32 %v260, %v313
  %v316 = vmul.f32 %v261, %v314
  %v317 = vadd.f32 %v310, %v315
  %v318 = vadd.f32 %v311, %v316
  %319 = vrot.lane.b32.xlu0 %v260, 127
  %v320 = vpop.permute.xlu0 %319
  %321 = vrot.lane.b32.xlu0 %v261, 127
  %v322 = vpop.permute.xlu0 %321
  %v323 = vsel %vm87, %v320, %v322
  %v324 = vsel %vm87, %v322, %v320
  %s325 = scalar_lea.vmem %s1, 224
  %v326 = vld [vmem:[%s325] sm:$0xff]
  %v327 = vld [vmem:[%s325 + $0x8] sm:$0xff]
  %v328 = vmul.f32 %v323, %v326
  %v329 = vmul.f32 %v324, %v327
  %v330 = vadd.f32 %v317, %v328
  %v331 = vadd.f32 %v318, %v329
  %332 = vrot.lane.b32.xlu0 %v260, 113
  %v333 = vpop.permute.xlu0 %332
  %334 = vrot.lane.b32.xlu0 %v261, 113
  %v335 = vpop.permute.xlu0 %334
  %v336 = vsel %vm101, %v333, %v335
  %v337 = vsel %vm101, %v335, %v333
  %s338 = scalar_lea.vmem %s1, 240
  %v339 = vld [vmem:[%s338] sm:$0xff]
  %v340 = vld [vmem:[%s338 + $0x8] sm:$0xff]
  %v341 = vmul.f32 %v336, %v339
  %v342 = vmul.f32 %v337, %v340
  %v343 = vadd.f32 %v330, %v341
  %v344 = vadd.f32 %v331, %v342
  %345 = vrot.lane.b32.xlu0 %v260, 112
  %v346 = vpop.permute.xlu0 %345
  %347 = vrot.lane.b32.xlu0 %v261, 112
  %v348 = vpop.permute.xlu0 %347
  %v349 = vsel %vm115, %v346, %v348
  %v350 = vsel %vm115, %v348, %v346
  %s351 = scalar_lea.vmem %s1, 256
  %v352 = vld [vmem:[%s351] sm:$0xff]
  %v353 = vld [vmem:[%s351 + $0x8] sm:$0xff]
  %v354 = vmul.f32 %v349, %v352
  %v355 = vmul.f32 %v350, %v353
  %v356 = vadd.f32 %v343, %v354
  %v357 = vadd.f32 %v344, %v355
  %358 = vrot.lane.b32.xlu0 %v260, 111
  %v359 = vpop.permute.xlu0 %358
  %360 = vrot.lane.b32.xlu0 %v261, 111
  %v361 = vpop.permute.xlu0 %360
  %v362 = vsel %vm129, %v359, %v361
  %v363 = vsel %vm129, %v361, %v359
  %s364 = scalar_lea.vmem %s1, 272
  %v365 = vld [vmem:[%s364] sm:$0xff]
  %v366 = vld [vmem:[%s364 + $0x8] sm:$0xff]
  %v367 = vmul.f32 %v362, %v365
  %v368 = vmul.f32 %v363, %v366
  %v369 = vadd.f32 %v356, %v367
  %v370 = vadd.f32 %v357, %v368
  %372 = vset.pattern.permute.xlu0 0
  %373 = vperm.xlu0 %372, %v19
  %v374 = vpop.permute.xlu0 %373
  %377 = vset.pattern.permute.xlu0 0
  %378 = vperm.xlu0 %377, %v20
  %v379 = vpop.permute.xlu0 %378
  %v381 = vperm.slane %v369, 0
  %v382 = vperm.slane %v370, 0
  %v383 = vmul.f32 %v374, %v381
  %v384 = vmul.f32 %v374, %v382
  %v385 = vmul.f32 %v379, %v381
  %v386 = vmul.f32 %v379, %v382
  %387 = vset.pattern.permute.xlu0 1
  %388 = vperm.xlu0 %387, %v19
  %v389 = vpop.permute.xlu0 %388
  %391 = vset.pattern.permute.xlu0 1
  %392 = vperm.xlu0 %391, %v20
  %v393 = vpop.permute.xlu0 %392
  %v395 = vperm.slane %v369, 1
  %v396 = vperm.slane %v370, 1
  %v397 = vmul.f32 %v389, %v395
  %v398 = vmul.f32 %v389, %v396
  %v399 = vmul.f32 %v393, %v395
  %v400 = vmul.f32 %v393, %v396
  %v401 = vadd.f32 %v383, %v397
  %v402 = vadd.f32 %v384, %v398
  %v403 = vadd.f32 %v385, %v399
  %v404 = vadd.f32 %v386, %v400
  %405 = vset.pattern.permute.xlu0 2
  %406 = vperm.xlu0 %405, %v19
  %v407 = vpop.permute.xlu0 %406
  %409 = vset.pattern.permute.xlu0 2
  %410 = vperm.xlu0 %409, %v20
  %v411 = vpop.permute.xlu0 %410
  %v413 = vperm.slane %v369, 2
  %v414 = vperm.slane %v370, 2
  %v415 = vmul.f32 %v407, %v413
  %v416 = vmul.f32 %v407, %v414
  %v417 = vmul.f32 %v411, %v413
  %v418 = vmul.f32 %v411, %v414
  %v419 = vadd.f32 %v401, %v415
  %v420 = vadd.f32 %v402, %v416
  %v421 = vadd.f32 %v403, %v417
  %v422 = vadd.f32 %v404, %v418
  %423 = vset.pattern.permute.xlu0 3
  %424 = vperm.xlu0 %423, %v19
  %v425 = vpop.permute.xlu0 %424
  %427 = vset.pattern.permute.xlu0 3
  %428 = vperm.xlu0 %427, %v20
  %v429 = vpop.permute.xlu0 %428
  %v431 = vperm.slane %v369, 3
  %v432 = vperm.slane %v370, 3
  %v433 = vmul.f32 %v425, %v431
  %v434 = vmul.f32 %v425, %v432
  %v435 = vmul.f32 %v429, %v431
  %v436 = vmul.f32 %v429, %v432
  %v437 = vadd.f32 %v419, %v433
  %v438 = vadd.f32 %v420, %v434
  %v439 = vadd.f32 %v421, %v435
  %v440 = vadd.f32 %v422, %v436
  %441 = vset.pattern.permute.xlu0 4
  %442 = vperm.xlu0 %441, %v19
  %v443 = vpop.permute.xlu0 %442
  %445 = vset.pattern.permute.xlu0 4
  %446 = vperm.xlu0 %445, %v20
  %v447 = vpop.permute.xlu0 %446
  %v449 = vperm.slane %v369, 4
  %v450 = vperm.slane %v370, 4
  %v451 = vmul.f32 %v443, %v449
  %v452 = vmul.f32 %v443, %v450
  %v453 = vmul.f32 %v447, %v449
  %v454 = vmul.f32 %v447, %v450
  %v455 = vadd.f32 %v437, %v451
  %v456 = vadd.f32 %v438, %v452
  %v457 = vadd.f32 %v439, %v453
  %v458 = vadd.f32 %v440, %v454
  %459 = vset.pattern.permute.xlu0 5
  %460 = vperm.xlu0 %459, %v19
  %v461 = vpop.permute.xlu0 %460
  %463 = vset.pattern.permute.xlu0 5
  %464 = vperm.xlu0 %463, %v20
  %v465 = vpop.permute.xlu0 %464
  %v467 = vperm.slane %v369, 5
  %v468 = vperm.slane %v370, 5
  %v469 = vmul.f32 %v461, %v467
  %v470 = vmul.f32 %v461, %v468
  %v471 = vmul.f32 %v465, %v467
  %v472 = vmul.f32 %v465, %v468
  %v473 = vadd.f32 %v455, %v469
  %v474 = vadd.f32 %v456, %v470
  %v475 = vadd.f32 %v457, %v471
  %v476 = vadd.f32 %v458, %v472
  %477 = vset.pattern.permute.xlu0 6
  %478 = vperm.xlu0 %477, %v19
  %v479 = vpop.permute.xlu0 %478
  %481 = vset.pattern.permute.xlu0 6
  %482 = vperm.xlu0 %481, %v20
  %v483 = vpop.permute.xlu0 %482
  %v485 = vperm.slane %v369, 6
  %v486 = vperm.slane %v370, 6
  %v487 = vmul.f32 %v479, %v485
  %v488 = vmul.f32 %v479, %v486
  %v489 = vmul.f32 %v483, %v485
  %v490 = vmul.f32 %v483, %v486
  %v491 = vadd.f32 %v473, %v487
  %v492 = vadd.f32 %v474, %v488
  %v493 = vadd.f32 %v475, %v489
  %v494 = vadd.f32 %v476, %v490
  %495 = vset.pattern.permute.xlu0 7
  %496 = vperm.xlu0 %495, %v19
  %v497 = vpop.permute.xlu0 %496
  %499 = vset.pattern.permute.xlu0 7
  %500 = vperm.xlu0 %499, %v20
  %v501 = vpop.permute.xlu0 %500
  %v503 = vperm.slane %v369, 7
  %v504 = vperm.slane %v370, 7
  %v505 = vmul.f32 %v497, %v503
  %v506 = vmul.f32 %v497, %v504
  %v507 = vmul.f32 %v501, %v503
  %v508 = vmul.f32 %v501, %v504
  %v509 = vadd.f32 %v491, %v505
  %v510 = vadd.f32 %v492, %v506
  %v511 = vadd.f32 %v493, %v507
  %v512 = vadd.f32 %v494, %v508
  %v513 = vadd.f32 %v509, %v510
  %514 = vadd.xlane.f32.xlu0 %v513
  %v515 = vpop.xlane.xlu0 %514
  %v516 = vadd.f32 %v511, %v512
  %517 = vadd.xlane.f32.xlu0 %v516
  %v518 = vpop.xlane.xlu0 %517
  %v519 = vmul.f32 %v509, %v509
  %v520 = vmul.f32 %v510, %v510
  %v521 = vmul.f32 %v511, %v511
  %v522 = vmul.f32 %v512, %v512
  %v523 = vadd.f32 %v519, %v520
  %524 = vadd.xlane.f32.xlu0 %v523
  %v525 = vpop.xlane.xlu0 %524
  %v526 = vadd.f32 %v521, %v522
  %527 = vadd.xlane.f32.xlu0 %v526
  %v528 = vpop.xlane.xlu0 %527
  %v529 = vadd.f32 %v515, %v518
  %v530 = vadd.f32 %v525, %v528
  %v531 = vmul.f32 %v529, 0.001953125
  %v532 = vmul.f32 %v530, 0.001953125
  %v533 = vmul.f32 %v531, %v531
  %v534 = vsub.f32 %v532, %v533
  %v535 = vmax.f32 %v534, 0.0
  %537 = vset.pattern.permute.xlu0 0
  %538 = vperm.xlu0 %537, %v531
  %v539 = vpop.permute.xlu0 %538
  %v541 = vsub.f32 %v509, %v539
  %v542 = vsub.f32 %v510, %v539
  %v543 = vsub.f32 %v511, %v539
  %v544 = vsub.f32 %v512, %v539
  %v545 = vadd.f32 %v535, 1e-05
  %v546 = vrsqrt.pop %v545
  %v547 = vmul.f32 %v546, %v545
  %v548 = vmul.f32 %v547, %v546
  %v549 = vmul.f32 0.5, %v548
  %v550 = vsub.f32 1.5, %v549
  %v551 = vmul.f32 %v546, %v550
  %vm552 = vweird.f32 %v545
  %vm553 = vweird.f32 %v546
  %vm554 = vmor %vm552, %vm553
  %v555 = vsel %vm554, %v546, %v551
  %557 = vset.pattern.permute.xlu0 0
  %558 = vperm.xlu0 %557, %v555
  %v559 = vpop.permute.xlu0 %558
  %v561 = vmul.f32 %v541, %v559
  %v562 = vmul.f32 %v542, %v559
  %v563 = vmul.f32 %v543, %v559
  %v564 = vmul.f32 %v544, %v559
  %565 = vst [vmem:[%s3] sm:$0xff] %v561
  %566 = vst [vmem:[%s3 + $0x8] sm:$0xff] %v562
  %567 = vst [vmem:[%s3 + $0x10] sm:$0xff] %v563
  %568 = vst [vmem:[%s3 + $0x18] sm:$0xff] %v564
  // Predicated region
  $region14: #{new_mixed_op.1} parent=0 // pred_check
    _
  $region15: #{new_mixed_op.1} parent=0 // pred_check_branch
    %570 = sbr.rel (0) target = $region17
  $region16: #{new_mixed_op.1} parent=0 // pred_region
    _
  $region17: #{new_mixed_op.1} parent=0 // pred_fallthru
    _
  // Predicated region
  $region18: #{new_mixed_op.1} parent=0 // pred_check
    _
  $region19: #{new_mixed_op.1} parent=0 // pred_check_branch
    %572 = sbr.rel (0) target = $region21
  $region20: #{new_mixed_op.1} parent=0 // pred_region
    _
  $region21: #{new_mixed_op.1} parent=0 // pred_fallthru
    _

</llo_original>
